<compile_context>
chip_gen: v5e
topology: v5e:2x2
jax: 0.10.0
libtpu: 0.0.40
codegen_flags: <defaults>
</compile_context>

<pallas_src>
import functools

import numpy as np
import jax
import jax.numpy as jnp
from jax import lax
from jax.experimental import pallas as pl
from jax.experimental.pallas import tpu as pltpu


def _round_up(n, m):
    return ((n + m - 1) // m) * m


def _density_kernel(layers, sub, bf16_act, x_ref, p_ref, o_ref):
    """layers: static tuple of (dim_out, dim_in, w_off, b_off, a_off, is_last).
    x_ref/o_ref: (tb_eff, r_pad).  p_ref: (P_pad, r_pad) packed, pre-activated params."""
    n_sub = x_ref.shape[0] // sub

    def prow(rw):
        # (1, r) parameter row; sublane broadcast is folded into the VPU op by Mosaic.
        return p_ref[pl.ds(rw, 1), :]

    def act_tanh(h):
        if bf16_act:
            # Opt-in: v6e/v7x only (bf16 EUP); ~2x EUP rate, breaks 1e-5 tolerance.
            return jnp.tanh(h.astype(jnp.bfloat16)).astype(jnp.float32)
        return jnp.tanh(h)

    def body(t, carry):
        base = pl.multiple_of(t * sub, sub)
        # width-1 input channel, (sub, r); cast to f32 in-kernel (no wrapper pass).
        state = [x_ref[pl.ds(base, sub), :].astype(jnp.float32)]
        for (dim_out, dim_in, w_off, b_off, a_off, is_last) in layers:
            new_state = []
            for j in range(dim_out):
                # h[b, r] = sum_m softplus(H)[j, m, r] * state_m[b, r] + b[j, r]
                h = prow(w_off + j * dim_in) * state[0]
                for m in range(1, dim_in):
                    h = h + prow(w_off + j * dim_in + m) * state[m]
                h = h + prow(b_off + j)
                if is_last:
                    # sigmoid(h) == 0.5*tanh(0.5*h) + 0.5 : single EUP push.
                    y = 0.5 * act_tanh(0.5 * h) + 0.5
                else:
                    y = prow(a_off + j) * act_tanh(h) + h
                new_state.append(y)
            state = new_state
        o_ref[pl.ds(base, sub), :] = state[0].astype(o_ref.dtype)
        return carry

    # Unroll so the scheduler interleaves independent EUP/VALU chains across sub-tiles.
    unroll = True if n_sub <= 8 else 4
    lax.fori_loop(0, n_sub, body, 0, unroll=unroll)


def _pack_params(params, r_pad):
    """params: K tuples (H:(r,do,di), a:(r,do), b:(r,do)) in the PyTorch layout.
    Returns one (P_pad, r_pad) slab of pre-activated rows + static row-layout metadata."""
    K = len(params)
    rows, layers, off = [], [], 0
    for i, (H, a, b) in enumerate(params, start=1):
        r, dim_out, dim_in = H.shape
        W = jax.nn.softplus(H.astype(jnp.float32))
        W = jnp.transpose(W, (1, 2, 0)).reshape(dim_out * dim_in, r)  # row j*di+m = W[j,m,:]
        w_off = off
        rows.append(W)
        off += dim_out * dim_in
        b_off = off
        rows.append(jnp.transpose(b.astype(jnp.float32), (1, 0)))     # (dim_out, r)
        off += dim_out
        if i < K:
            a_off = off
            rows.append(jnp.transpose(jnp.tanh(a.astype(jnp.float32)), (1, 0)))
            off += dim_out
        else:
            a_off = -1                                                 # a_K is never used
        layers.append((dim_out, dim_in, w_off, b_off, a_off, i == K))
    packed = jnp.concatenate(rows, axis=0)
    P, r = packed.shape
    P_pad = _round_up(max(P, 8), 8)
    packed = jnp.pad(packed, ((0, P_pad - P), (0, r_pad - r)))
    return packed, tuple(layers)


def multiple_univariate_density(x, params, *, tb=512, sub=32, bf16_activations=False):
    """Forward pass of MultipleUnivariateDensity.

    x: (B, r).  params: list of K tuples (H, a, b) in the PyTorch layout
    H: (r, dim_out, dim_in), a/b: (r, dim_out).
    bf16_activations: opt-in bf16 transcendentals (v6e/v7x only; not 1e-5 accurate)."""
    B, r = x.shape
    r_pad = _round_up(r, 128)

    sub = max(8, _round_up(sub, 8))
    tb = max(sub, _round_up(tb, sub))

    # Keep >= ~4 grid steps when the batch allows it: hides the pipeline prologue DMA
    # and, on v7x, lets the single "parallel" axis shard across both TensorCores.
    min_steps = 4
    tb_eff = min(tb, max(sub, _round_up(pl.cdiv(B, min_steps), sub)))
    grid = pl.cdiv(B, tb_eff)   # ragged batch tail handled by Pallas boundary masking

    packed, layers = _pack_params(params, r_pad)

    # No wrapper-side batch pad / cast; only a non-128-multiple r needs a lane pad.
    x_in = x if r_pad == r else jnp.pad(x, ((0, 0), (0, r_pad - r)))

    flops_pe = sum(do * (2 * di + (3 if last else 2))
                   for (do, di, _, _, _, last) in layers)
    trans_pe = sum(do for (do, *_rest) in layers)
    cost = pl.CostEstimate(
        flops=int(flops_pe) * B * r,
        transcendentals=int(trans_pe) * B * r,
        bytes_accessed=2 * B * r * int(x.dtype.itemsize) + int(packed.size) * 4,
    )

    out = pl.pallas_call(
        functools.partial(_density_kernel, layers, sub, bool(bf16_activations)),
        out_shape=jax.ShapeDtypeStruct((B, r_pad), x.dtype),
        grid_spec=pltpu.PrefetchScalarGridSpec(
            num_scalar_prefetch=0,
            grid=(grid,),
            in_specs=[
                # TODO(synk): on v5e, if an xprof trace shows exposed input DMA, add
                # pipeline_mode=pl.Buffered(3) to this BlockSpec.
                pl.BlockSpec((tb_eff, r_pad), lambda i: (i, 0)),
                pl.BlockSpec(packed.shape, lambda i: (0, 0)),   # resident across the grid
            ],
            out_specs=pl.BlockSpec((tb_eff, r_pad), lambda i: (i, 0)),
        ),
        compiler_params=pltpu.CompilerParams(dimension_semantics=("parallel",)),
        cost_estimate=cost,
    )(x_in, packed)

    return out if r_pad == r else out[:, :r]


def reference_forward(x, params, K):
    """Pure-JAX mirror of the PyTorch forward (for validation)."""
    for i in range(1, K + 1):
        H, a, b = params[i - 1]
        if i == 1:
            xi = x[..., None, None]                     # (B, r, 1, 1)
        else:
            xi = x[..., None]                           # (B, r, l, 1)
        h = jnp.matmul(jax.nn.softplus(H), xi)          # (B, r, dim_out, 1)
        h = jnp.squeeze(h)
        if i < K:
            h = h + b                                   # b: (r, dim_out)
        else:
            h = h + jnp.squeeze(b)                      # b: (r,) after squeeze
        if i == K:
            x = jax.nn.sigmoid(h)
        else:
            x = jnp.tanh(a) * jnp.tanh(h) + h
    return x


def _make_params(key, l, K, r):
    params = []
    for i in range(1, K + 1):
        dim_in = 1 if i == 1 else l
        dim_out = 1 if i == K else l
        key, k1, k2, k3 = jax.random.split(key, 4)
        H = jax.random.normal(k1, (r, dim_out, dim_in), jnp.float32)
        a = jax.random.normal(k2, (r, dim_out), jnp.float32)
        b = jax.random.normal(k3, (r, dim_out), jnp.float32)
        params.append((H, a, b))
    return key, params


if __name__ == "__main__":
    # MultipleUnivariateDensity(l=3, K=4).  Cases exercise: single partial tile (B=19),
    # multi-step grid with a ragged tail + unrolled sub-tile loop (B=520), and the
    # lane-pad path for r not a multiple of 128 (r=64).
    l, K = 3, 4
    key = jax.random.PRNGKey(0)

    for r, batches in ((128, (19, 520)), (64, (37,))):
        key, params = _make_params(key, l, K, r)
        for B in batches:
            key, kx = jax.random.split(key)
            x = jax.random.normal(kx, (B, r), jnp.float32)

            out = jax.block_until_ready(multiple_univariate_density(x, params))
            ref = jax.block_until_ready(reference_forward(x, params, K))

            assert out.shape == (B, r) and out.dtype == x.dtype
            np.testing.assert_allclose(np.asarray(out), np.asarray(ref),
                                       rtol=1e-5, atol=1e-5)

    print("KERNEL_OK")
</pallas_src>

<mosaic_0001>
module attributes {stable_mosaic.version = 11 : i64} {
  func.func @_density_kernel(%arg0: i32, %arg1: memref<32x128xf32, #tpu.memory_space<vmem>>, %arg2: memref<48x128xf32, #tpu.memory_space<vmem>>, %arg3: memref<32x128xf32, #tpu.memory_space<vmem>>) attributes {dimension_semantics = [#tpu.dimension_semantics<parallel>], iteration_bounds = array<i64: 1>, scalar_prefetch = 0 : i64, scratch_operands = 0 : i64, tpu.core_type = #tpu.core_type<tc>, window_params = [{transform_indices = @transform_0, window_bounds = array<i64: 32, 128>}, {pipeline_mode = #tpu.pipeline_mode<synchronous>, transform_indices = @transform_1, window_bounds = array<i64: 48, 128>}, {transform_indices = @transform_2, window_bounds = array<i64: 32, 128>}]} {
    %c0_i32 = arith.constant 0 : i32
    %c32_i32 = arith.constant 32 : i32
    %0 = arith.muli %c0_i32, %c32_i32 : i32
    %1 = tpu.assume_multiple %0, 32 : i32
    %2 = arith.index_cast %1 : i32 to index
    %c0 = arith.constant 0 : index
    %3 = vector.load %arg1[%2, %c0] : memref<32x128xf32, #tpu.memory_space<vmem>>, vector<32x128xf32>
    %c0_0 = arith.constant 0 : index
    %c0_1 = arith.constant 0 : index
    %4 = vector.load %arg2[%c0_0, %c0_1] : memref<48x128xf32, #tpu.memory_space<vmem>>, vector<1x128xf32>
    %5 = vector.broadcast %4 : vector<1x128xf32> to vector<32x128xf32>
    %6 = arith.mulf %5, %3 : vector<32x128xf32>
    %c3 = arith.constant 3 : index
    %c0_2 = arith.constant 0 : index
    %7 = vector.load %arg2[%c3, %c0_2] : memref<48x128xf32, #tpu.memory_space<vmem>>, vector<1x128xf32>
    %8 = vector.broadcast %7 : vector<1x128xf32> to vector<32x128xf32>
    %9 = arith.addf %6, %8 : vector<32x128xf32>
    %c6 = arith.constant 6 : index
    %c0_3 = arith.constant 0 : index
    %10 = vector.load %arg2[%c6, %c0_3] : memref<48x128xf32, #tpu.memory_space<vmem>>, vector<1x128xf32>
    %11 = math.tanh %9 : vector<32x128xf32>
    %12 = vector.broadcast %10 : vector<1x128xf32> to vector<32x128xf32>
    %13 = arith.mulf %12, %11 : vector<32x128xf32>
    %14 = arith.addf %13, %9 : vector<32x128xf32>
    %c1 = arith.constant 1 : index
    %c0_4 = arith.constant 0 : index
    %15 = vector.load %arg2[%c1, %c0_4] : memref<48x128xf32, #tpu.memory_space<vmem>>, vector<1x128xf32>
    %16 = vector.broadcast %15 : vector<1x128xf32> to vector<32x128xf32>
    %17 = arith.mulf %16, %3 : vector<32x128xf32>
    %c4 = arith.constant 4 : index
    %c0_5 = arith.constant 0 : index
    %18 = vector.load %arg2[%c4, %c0_5] : memref<48x128xf32, #tpu.memory_space<vmem>>, vector<1x128xf32>
    %19 = vector.broadcast %18 : vector<1x128xf32> to vector<32x128xf32>
    %20 = arith.addf %17, %19 : vector<32x128xf32>
    %c7 = arith.constant 7 : index
    %c0_6 = arith.constant 0 : index
    %21 = vector.load %arg2[%c7, %c0_6] : memref<48x128xf32, #tpu.memory_space<vmem>>, vector<1x128xf32>
    %22 = math.tanh %20 : vector<32x128xf32>
    %23 = vector.broadcast %21 : vector<1x128xf32> to vector<32x128xf32>
    %24 = arith.mulf %23, %22 : vector<32x128xf32>
    %25 = arith.addf %24, %20 : vector<32x128xf32>
    %c2 = arith.constant 2 : index
    %c0_7 = arith.constant 0 : index
    %26 = vector.load %arg2[%c2, %c0_7] : memref<48x128xf32, #tpu.memory_space<vmem>>, vector<1x128xf32>
    %27 = vector.broadcast %26 : vector<1x128xf32> to vector<32x128xf32>
    %28 = arith.mulf %27, %3 : vector<32x128xf32>
    %c5 = arith.constant 5 : index
    %c0_8 = arith.constant 0 : index
    %29 = vector.load %arg2[%c5, %c0_8] : memref<48x128xf32, #tpu.memory_space<vmem>>, vector<1x128xf32>
    %30 = vector.broadcast %29 : vector<1x128xf32> to vector<32x128xf32>
    %31 = arith.addf %28, %30 : vector<32x128xf32>
    %c8 = arith.constant 8 : index
    %c0_9 = arith.constant 0 : index
    %32 = vector.load %arg2[%c8, %c0_9] : memref<48x128xf32, #tpu.memory_space<vmem>>, vector<1x128xf32>
    %33 = math.tanh %31 : vector<32x128xf32>
    %34 = vector.broadcast %32 : vector<1x128xf32> to vector<32x128xf32>
    %35 = arith.mulf %34, %33 : vector<32x128xf32>
    %36 = arith.addf %35, %31 : vector<32x128xf32>
    %c9 = arith.constant 9 : index
    %c0_10 = arith.constant 0 : index
    %37 = vector.load %arg2[%c9, %c0_10] : memref<48x128xf32, #tpu.memory_space<vmem>>, vector<1x128xf32>
    %38 = vector.broadcast %37 : vector<1x128xf32> to vector<32x128xf32>
    %39 = arith.mulf %38, %14 : vector<32x128xf32>
    %c10 = arith.constant 10 : index
    %c0_11 = arith.constant 0 : index
    %40 = vector.load %arg2[%c10, %c0_11] : memref<48x128xf32, #tpu.memory_space<vmem>>, vector<1x128xf32>
    %41 = vector.broadcast %40 : vector<1x128xf32> to vector<32x128xf32>
    %42 = arith.mulf %41, %25 : vector<32x128xf32>
    %43 = arith.addf %39, %42 : vector<32x128xf32>
    %c11 = arith.constant 11 : index
    %c0_12 = arith.constant 0 : index
    %44 = vector.load %arg2[%c11, %c0_12] : memref<48x128xf32, #tpu.memory_space<vmem>>, vector<1x128xf32>
    %45 = vector.broadcast %44 : vector<1x128xf32> to vector<32x128xf32>
    %46 = arith.mulf %45, %36 : vector<32x128xf32>
    %47 = arith.addf %43, %46 : vector<32x128xf32>
    %c18 = arith.constant 18 : index
    %c0_13 = arith.constant 0 : index
    %48 = vector.load %arg2[%c18, %c0_13] : memref<48x128xf32, #tpu.memory_space<vmem>>, vector<1x128xf32>
    %49 = vector.broadcast %48 : vector<1x128xf32> to vector<32x128xf32>
    %50 = arith.addf %47, %49 : vector<32x128xf32>
    %c21 = arith.constant 21 : index
    %c0_14 = arith.constant 0 : index
    %51 = vector.load %arg2[%c21, %c0_14] : memref<48x128xf32, #tpu.memory_space<vmem>>, vector<1x128xf32>
    %52 = math.tanh %50 : vector<32x128xf32>
    %53 = vector.broadcast %51 : vector<1x128xf32> to vector<32x128xf32>
    %54 = arith.mulf %53, %52 : vector<32x128xf32>
    %55 = arith.addf %54, %50 : vector<32x128xf32>
    %c12 = arith.constant 12 : index
    %c0_15 = arith.constant 0 : index
    %56 = vector.load %arg2[%c12, %c0_15] : memref<48x128xf32, #tpu.memory_space<vmem>>, vector<1x128xf32>
    %57 = vector.broadcast %56 : vector<1x128xf32> to vector<32x128xf32>
    %58 = arith.mulf %57, %14 : vector<32x128xf32>
    %c13 = arith.constant 13 : index
    %c0_16 = arith.constant 0 : index
    %59 = vector.load %arg2[%c13, %c0_16] : memref<48x128xf32, #tpu.memory_space<vmem>>, vector<1x128xf32>
    %60 = vector.broadcast %59 : vector<1x128xf32> to vector<32x128xf32>
    %61 = arith.mulf %60, %25 : vector<32x128xf32>
    %62 = arith.addf %58, %61 : vector<32x128xf32>
    %c14 = arith.constant 14 : index
    %c0_17 = arith.constant 0 : index
    %63 = vector.load %arg2[%c14, %c0_17] : memref<48x128xf32, #tpu.memory_space<vmem>>, vector<1x128xf32>
    %64 = vector.broadcast %63 : vector<1x128xf32> to vector<32x128xf32>
    %65 = arith.mulf %64, %36 : vector<32x128xf32>
    %66 = arith.addf %62, %65 : vector<32x128xf32>
    %c19 = arith.constant 19 : index
    %c0_18 = arith.constant 0 : index
    %67 = vector.load %arg2[%c19, %c0_18] : memref<48x128xf32, #tpu.memory_space<vmem>>, vector<1x128xf32>
    %68 = vector.broadcast %67 : vector<1x128xf32> to vector<32x128xf32>
    %69 = arith.addf %66, %68 : vector<32x128xf32>
    %c22 = arith.constant 22 : index
    %c0_19 = arith.constant 0 : index
    %70 = vector.load %arg2[%c22, %c0_19] : memref<48x128xf32, #tpu.memory_space<vmem>>, vector<1x128xf32>
    %71 = math.tanh %69 : vector<32x128xf32>
    %72 = vector.broadcast %70 : vector<1x128xf32> to vector<32x128xf32>
    %73 = arith.mulf %72, %71 : vector<32x128xf32>
    %74 = arith.addf %73, %69 : vector<32x128xf32>
    %c15 = arith.constant 15 : index
    %c0_20 = arith.constant 0 : index
    %75 = vector.load %arg2[%c15, %c0_20] : memref<48x128xf32, #tpu.memory_space<vmem>>, vector<1x128xf32>
    %76 = vector.broadcast %75 : vector<1x128xf32> to vector<32x128xf32>
    %77 = arith.mulf %76, %14 : vector<32x128xf32>
    %c16 = arith.constant 16 : index
    %c0_21 = arith.constant 0 : index
    %78 = vector.load %arg2[%c16, %c0_21] : memref<48x128xf32, #tpu.memory_space<vmem>>, vector<1x128xf32>
    %79 = vector.broadcast %78 : vector<1x128xf32> to vector<32x128xf32>
    %80 = arith.mulf %79, %25 : vector<32x128xf32>
    %81 = arith.addf %77, %80 : vector<32x128xf32>
    %c17 = arith.constant 17 : index
    %c0_22 = arith.constant 0 : index
    %82 = vector.load %arg2[%c17, %c0_22] : memref<48x128xf32, #tpu.memory_space<vmem>>, vector<1x128xf32>
    %83 = vector.broadcast %82 : vector<1x128xf32> to vector<32x128xf32>
    %84 = arith.mulf %83, %36 : vector<32x128xf32>
    %85 = arith.addf %81, %84 : vector<32x128xf32>
    %c20 = arith.constant 20 : index
    %c0_23 = arith.constant 0 : index
    %86 = vector.load %arg2[%c20, %c0_23] : memref<48x128xf32, #tpu.memory_space<vmem>>, vector<1x128xf32>
    %87 = vector.broadcast %86 : vector<1x128xf32> to vector<32x128xf32>
    %88 = arith.addf %85, %87 : vector<32x128xf32>
    %c23 = arith.constant 23 : index
    %c0_24 = arith.constant 0 : index
    %89 = vector.load %arg2[%c23, %c0_24] : memref<48x128xf32, #tpu.memory_space<vmem>>, vector<1x128xf32>
    %90 = math.tanh %88 : vector<32x128xf32>
    %91 = vector.broadcast %89 : vector<1x128xf32> to vector<32x128xf32>
    %92 = arith.mulf %91, %90 : vector<32x128xf32>
    %93 = arith.addf %92, %88 : vector<32x128xf32>
    %c24 = arith.constant 24 : index
    %c0_25 = arith.constant 0 : index
    %94 = vector.load %arg2[%c24, %c0_25] : memref<48x128xf32, #tpu.memory_space<vmem>>, vector<1x128xf32>
    %95 = vector.broadcast %94 : vector<1x128xf32> to vector<32x128xf32>
    %96 = arith.mulf %95, %55 : vector<32x128xf32>
    %c25 = arith.constant 25 : index
    %c0_26 = arith.constant 0 : index
    %97 = vector.load %arg2[%c25, %c0_26] : memref<48x128xf32, #tpu.memory_space<vmem>>, vector<1x128xf32>
    %98 = vector.broadcast %97 : vector<1x128xf32> to vector<32x128xf32>
    %99 = arith.mulf %98, %74 : vector<32x128xf32>
    %100 = arith.addf %96, %99 : vector<32x128xf32>
    %c26 = arith.constant 26 : index
    %c0_27 = arith.constant 0 : index
    %101 = vector.load %arg2[%c26, %c0_27] : memref<48x128xf32, #tpu.memory_space<vmem>>, vector<1x128xf32>
    %102 = vector.broadcast %101 : vector<1x128xf32> to vector<32x128xf32>
    %103 = arith.mulf %102, %93 : vector<32x128xf32>
    %104 = arith.addf %100, %103 : vector<32x128xf32>
    %c33 = arith.constant 33 : index
    %c0_28 = arith.constant 0 : index
    %105 = vector.load %arg2[%c33, %c0_28] : memref<48x128xf32, #tpu.memory_space<vmem>>, vector<1x128xf32>
    %106 = vector.broadcast %105 : vector<1x128xf32> to vector<32x128xf32>
    %107 = arith.addf %104, %106 : vector<32x128xf32>
    %c36 = arith.constant 36 : index
    %c0_29 = arith.constant 0 : index
    %108 = vector.load %arg2[%c36, %c0_29] : memref<48x128xf32, #tpu.memory_space<vmem>>, vector<1x128xf32>
    %109 = math.tanh %107 : vector<32x128xf32>
    %110 = vector.broadcast %108 : vector<1x128xf32> to vector<32x128xf32>
    %111 = arith.mulf %110, %109 : vector<32x128xf32>
    %112 = arith.addf %111, %107 : vector<32x128xf32>
    %c27 = arith.constant 27 : index
    %c0_30 = arith.constant 0 : index
    %113 = vector.load %arg2[%c27, %c0_30] : memref<48x128xf32, #tpu.memory_space<vmem>>, vector<1x128xf32>
    %114 = vector.broadcast %113 : vector<1x128xf32> to vector<32x128xf32>
    %115 = arith.mulf %114, %55 : vector<32x128xf32>
    %c28 = arith.constant 28 : index
    %c0_31 = arith.constant 0 : index
    %116 = vector.load %arg2[%c28, %c0_31] : memref<48x128xf32, #tpu.memory_space<vmem>>, vector<1x128xf32>
    %117 = vector.broadcast %116 : vector<1x128xf32> to vector<32x128xf32>
    %118 = arith.mulf %117, %74 : vector<32x128xf32>
    %119 = arith.addf %115, %118 : vector<32x128xf32>
    %c29 = arith.constant 29 : index
    %c0_32 = arith.constant 0 : index
    %120 = vector.load %arg2[%c29, %c0_32] : memref<48x128xf32, #tpu.memory_space<vmem>>, vector<1x128xf32>
    %121 = vector.broadcast %120 : vector<1x128xf32> to vector<32x128xf32>
    %122 = arith.mulf %121, %93 : vector<32x128xf32>
    %123 = arith.addf %119, %122 : vector<32x128xf32>
    %c34 = arith.constant 34 : index
    %c0_33 = arith.constant 0 : index
    %124 = vector.load %arg2[%c34, %c0_33] : memref<48x128xf32, #tpu.memory_space<vmem>>, vector<1x128xf32>
    %125 = vector.broadcast %124 : vector<1x128xf32> to vector<32x128xf32>
    %126 = arith.addf %123, %125 : vector<32x128xf32>
    %c37 = arith.constant 37 : index
    %c0_34 = arith.constant 0 : index
    %127 = vector.load %arg2[%c37, %c0_34] : memref<48x128xf32, #tpu.memory_space<vmem>>, vector<1x128xf32>
    %128 = math.tanh %126 : vector<32x128xf32>
    %129 = vector.broadcast %127 : vector<1x128xf32> to vector<32x128xf32>
    %130 = arith.mulf %129, %128 : vector<32x128xf32>
    %131 = arith.addf %130, %126 : vector<32x128xf32>
    %c30 = arith.constant 30 : index
    %c0_35 = arith.constant 0 : index
    %132 = vector.load %arg2[%c30, %c0_35] : memref<48x128xf32, #tpu.memory_space<vmem>>, vector<1x128xf32>
    %133 = vector.broadcast %132 : vector<1x128xf32> to vector<32x128xf32>
    %134 = arith.mulf %133, %55 : vector<32x128xf32>
    %c31 = arith.constant 31 : index
    %c0_36 = arith.constant 0 : index
    %135 = vector.load %arg2[%c31, %c0_36] : memref<48x128xf32, #tpu.memory_space<vmem>>, vector<1x128xf32>
    %136 = vector.broadcast %135 : vector<1x128xf32> to vector<32x128xf32>
    %137 = arith.mulf %136, %74 : vector<32x128xf32>
    %138 = arith.addf %134, %137 : vector<32x128xf32>
    %c32 = arith.constant 32 : index
    %c0_37 = arith.constant 0 : index
    %139 = vector.load %arg2[%c32, %c0_37] : memref<48x128xf32, #tpu.memory_space<vmem>>, vector<1x128xf32>
    %140 = vector.broadcast %139 : vector<1x128xf32> to vector<32x128xf32>
    %141 = arith.mulf %140, %93 : vector<32x128xf32>
    %142 = arith.addf %138, %141 : vector<32x128xf32>
    %c35 = arith.constant 35 : index
    %c0_38 = arith.constant 0 : index
    %143 = vector.load %arg2[%c35, %c0_38] : memref<48x128xf32, #tpu.memory_space<vmem>>, vector<1x128xf32>
    %144 = vector.broadcast %143 : vector<1x128xf32> to vector<32x128xf32>
    %145 = arith.addf %142, %144 : vector<32x128xf32>
    %c38 = arith.constant 38 : index
    %c0_39 = arith.constant 0 : index
    %146 = vector.load %arg2[%c38, %c0_39] : memref<48x128xf32, #tpu.memory_space<vmem>>, vector<1x128xf32>
    %147 = math.tanh %145 : vector<32x128xf32>
    %148 = vector.broadcast %146 : vector<1x128xf32> to vector<32x128xf32>
    %149 = arith.mulf %148, %147 : vector<32x128xf32>
    %150 = arith.addf %149, %145 : vector<32x128xf32>
    %c39 = arith.constant 39 : index
    %c0_40 = arith.constant 0 : index
    %151 = vector.load %arg2[%c39, %c0_40] : memref<48x128xf32, #tpu.memory_space<vmem>>, vector<1x128xf32>
    %152 = vector.broadcast %151 : vector<1x128xf32> to vector<32x128xf32>
    %153 = arith.mulf %152, %112 : vector<32x128xf32>
    %c40 = arith.constant 40 : index
    %c0_41 = arith.constant 0 : index
    %154 = vector.load %arg2[%c40, %c0_41] : memref<48x128xf32, #tpu.memory_space<vmem>>, vector<1x128xf32>
    %155 = vector.broadcast %154 : vector<1x128xf32> to vector<32x128xf32>
    %156 = arith.mulf %155, %131 : vector<32x128xf32>
    %157 = arith.addf %153, %156 : vector<32x128xf32>
    %c41 = arith.constant 41 : index
    %c0_42 = arith.constant 0 : index
    %158 = vector.load %arg2[%c41, %c0_42] : memref<48x128xf32, #tpu.memory_space<vmem>>, vector<1x128xf32>
    %159 = vector.broadcast %158 : vector<1x128xf32> to vector<32x128xf32>
    %160 = arith.mulf %159, %150 : vector<32x128xf32>
    %161 = arith.addf %157, %160 : vector<32x128xf32>
    %c42 = arith.constant 42 : index
    %c0_43 = arith.constant 0 : index
    %162 = vector.load %arg2[%c42, %c0_43] : memref<48x128xf32, #tpu.memory_space<vmem>>, vector<1x128xf32>
    %163 = vector.broadcast %162 : vector<1x128xf32> to vector<32x128xf32>
    %164 = arith.addf %161, %163 : vector<32x128xf32>
    %cst = arith.constant 5.000000e-01 : f32
    %165 = vector.broadcast %cst : f32 to vector<32x128xf32>
    %166 = arith.mulf %165, %164 : vector<32x128xf32>
    %167 = math.tanh %166 : vector<32x128xf32>
    %cst_44 = arith.constant 5.000000e-01 : f32
    %168 = vector.broadcast %cst_44 : f32 to vector<32x128xf32>
    %169 = arith.mulf %168, %167 : vector<32x128xf32>
    %cst_45 = arith.constant 5.000000e-01 : f32
    %170 = vector.broadcast %cst_45 : f32 to vector<32x128xf32>
    %171 = arith.addf %169, %170 : vector<32x128xf32>
    %172 = arith.index_cast %1 : i32 to index
    %c0_46 = arith.constant 0 : index
    %173 = vector.load %arg3[%172, %c0_46] : memref<32x128xf32, #tpu.memory_space<vmem>>, vector<32x128xf32>
    tpu.vector_store %arg3[%172, %c0_46], %171 {strides = array<i32>} : memref<32x128xf32, #tpu.memory_space<vmem>>, vector<32x128xf32>,
    %c1_i32 = arith.constant 1 : i32
    return
  }
  func.func @transform_0(%arg0: i32) -> (i32, i32) {
    %c0_i32 = arith.constant 0 : i32
    %c0_i32_0 = arith.constant 0 : i32
    return %arg0, %c0_i32 : i32, i32
  }
  func.func @transform_1(%arg0: i32) -> (i32, i32) {
    %c0_i32 = arith.constant 0 : i32
    %c0_i32_0 = arith.constant 0 : i32
    %c0_i32_1 = arith.constant 0 : i32
    return %c0_i32, %c0_i32_0 : i32, i32
  }
  func.func @transform_2(%arg0: i32) -> (i32, i32) {
    %c0_i32 = arith.constant 0 : i32
    %c0_i32_0 = arith.constant 0 : i32
    return %arg0, %c0_i32 : i32, i32
  }
}

</mosaic_0001>

<llo_original>
// kernel: tpu_custom_call.1
$region0: #{tpu_custom_call.1}
  #allocation0 [shape = 'u32[]', space=smem, size = 0x4, offset = 0x4, fixed_abs, tag = 'smem constant byte address 0x4 - core index']
  #allocation1 [shape = 'u32[72,128]{1,0:T(1,128)}', space=vmem, size = 0x9000, scoped, tag = 'internal scratch']
  %s0 = inlined_call_operand.hbm [shape: f32[19,128], index: 0, kind: input, shape index: {}]
  %s1 = inlined_call_operand.hbm [shape: f32[48,128], index: 1, kind: input, shape index: {}]
  %s2 = inlined_call_operand.hbm [shape: f32[19,128], index: 2, kind: output, shape index: {}]
  %s3 = sld [smem:[#allocation0]]
  $region26: #{tpu_custom_call.1} parent=0
    _
  %s5 = ssub.s32 1, %s3
  %s6 = scalar_select 0, %s5, %s3
  $region1: #{tpu_custom_call.1} parent=0
    #allocation2 [shape = 'u8[16384]{0}', space=vmem, size = 0x4000, scoped, tag = 'input window, operand 0, single buffered']
    #allocation3 [shape = 's32[1]{0}', space=sflag, size = 0x4, scoped, tag = 'scoped memory for tpu_custom_call.1']
    #allocation4 [shape = 's32[1]{0}', space=sflag, size = 0x4, scoped, tag = 'scoped memory for tpu_custom_call.1']
    #allocation5 [shape = 'u8[24576]{0}', space=vmem, size = 0x6000, scoped, tag = 'input window, operand 1, single buffered']
    #allocation6 [shape = 's32[1]{0}', space=sflag, size = 0x4, scoped, tag = 'scoped memory for tpu_custom_call.1']
    #allocation7 [shape = 'u8[16384]{0}', space=vmem, size = 0x4000, scoped, tag = 'output window, operand 0, single buffered']
    %7 = vsyncpa [#allocation3], 0
    %8 = vsyncpa [#allocation6], 0
    %9 = vsyncpa [#allocation4], 0
    // Predicated region
    $region2: #{tpu_custom_call.1} parent=1 // pred_check
      _
    $region3: #{tpu_custom_call.1} parent=1 // pred_check_branch
      %11 = sbr.rel (0) target = $region5
    $region4: #{tpu_custom_call.1} parent=1 // pred_region
      %13 = vsyncadd [#allocation3], 128
      %s14 = sshll.u32 %s0, 4
      %s15 = int_to_ptr.hbm [resolvable:$true] %s14
      %s16 = sshll.u32 [#allocation2], 4
      %s17 = int_to_ptr.vmem [resolvable:$true] %s16
      %22 = dma.hbm_to_vmem [thread:$0]  %s15, 384, %s17, [#allocation3], 128, 128, 8
    $region5: #{tpu_custom_call.1} parent=1 // pred_fallthru
      _
    // Predicated region
    $region6: #{tpu_custom_call.1} parent=1 // pred_check
      _
    $region7: #{tpu_custom_call.1} parent=1 // pred_check_branch
      %24 = sbr.rel (0) target = $region9
    $region8: #{tpu_custom_call.1} parent=1 // pred_region
      %26 = vsyncadd [#allocation6], 0
      %s27 = sshll.u32 %s1, 4
      %s28 = int_to_ptr.hbm [resolvable:$true] %s27
      %s29 = sshll.u32 [#allocation5], 4
      %s30 = int_to_ptr.vmem [resolvable:$true] %s29
      %35 = dma.hbm_to_vmem [thread:$0]  %s28, 768, %s30, [#allocation6], 128, 128, 8
    $region9: #{tpu_custom_call.1} parent=1 // pred_fallthru
      _
    // Predicated region
    $region10: #{tpu_custom_call.1} parent=1 // pred_check
      _
    $region11: #{tpu_custom_call.1} parent=1 // pred_check_branch
      %37 = sbr.rel (0) target = $region13
    $region12: #{tpu_custom_call.1} parent=1 // pred_region
      %39 = dma.done [#allocation3], 512
    $region13: #{tpu_custom_call.1} parent=1 // pred_fallthru
      _
    // Predicated region
    $region14: #{tpu_custom_call.1} parent=1 // pred_check
      _
    $region15: #{tpu_custom_call.1} parent=1 // pred_check_branch
      %41 = sbr.rel (0) target = $region17
    $region16: #{tpu_custom_call.1} parent=1 // pred_region
      %43 = dma.done [#allocation6], 768
    $region17: #{tpu_custom_call.1} parent=1 // pred_fallthru
      _
    %v44 = vld [vmem:[#allocation2] sm:$0xff]
    %v45 = vld [vmem:[#allocation2 + $0x8] sm:$0xff]
    %v46 = vld [vmem:[#allocation2 + $0x10] sm:$0xff]
    %v47 = vld [vmem:[#allocation2 + $0x18] sm:$0xff]
    %v48 = vld [vmem:[#allocation5] sm:$0x1]
    %v49 = vperm.slane %v48, 0
    %v50 = vmul.f32 %v49, %v44
    %v51 = vmul.f32 %v49, %v45
    %v52 = vmul.f32 %v49, %v46
    %v53 = vmul.f32 %v49, %v47
    %v54 = vld [vmem:[#allocation5 + $0x3] sm:$0x1]
    %v55 = vperm.slane %v54, 0
    %v56 = vadd.f32 %v50, %v55
    %v57 = vadd.f32 %v51, %v55
    %v58 = vadd.f32 %v52, %v55
    %v59 = vadd.f32 %v53, %v55
    %v60 = vld [vmem:[#allocation5 + $0x6] sm:$0x1]
    %v61 = vtanh.pop %v56
    %v62 = vtanh.pop %v57
    %v63 = vtanh.pop %v58
    %v64 = vtanh.pop %v59
    %v65 = vperm.slane %v60, 0
    %v66 = vmul.f32 %v65, %v61
    %v67 = vmul.f32 %v65, %v62
    %v68 = vmul.f32 %v65, %v63
    %v69 = vmul.f32 %v65, %v64
    %v70 = vadd.f32 %v66, %v56
    %v71 = vadd.f32 %v67, %v57
    %v72 = vadd.f32 %v68, %v58
    %v73 = vadd.f32 %v69, %v59
    %v74 = vld [vmem:[#allocation5 + $0x1] sm:$0x1]
    %v75 = vperm.slane %v74, 0
    %v76 = vmul.f32 %v75, %v44
    %v77 = vmul.f32 %v75, %v45
    %v78 = vmul.f32 %v75, %v46
    %v79 = vmul.f32 %v75, %v47
    %v80 = vld [vmem:[#allocation5 + $0x4] sm:$0x1]
    %v81 = vperm.slane %v80, 0
    %v82 = vadd.f32 %v76, %v81
    %v83 = vadd.f32 %v77, %v81
    %v84 = vadd.f32 %v78, %v81
    %v85 = vadd.f32 %v79, %v81
    %v86 = vld [vmem:[#allocation5 + $0x7] sm:$0x1]
    %v87 = vtanh.pop %v82
    %v88 = vtanh.pop %v83
    %v89 = vtanh.pop %v84
    %v90 = vtanh.pop %v85
    %v91 = vperm.slane %v86, 0
    %v92 = vmul.f32 %v91, %v87
    %v93 = vmul.f32 %v91, %v88
    %v94 = vmul.f32 %v91, %v89
    %v95 = vmul.f32 %v91, %v90
    %v96 = vadd.f32 %v92, %v82
    %v97 = vadd.f32 %v93, %v83
    %v98 = vadd.f32 %v94, %v84
    %v99 = vadd.f32 %v95, %v85
    %v100 = vld [vmem:[#allocation5 + $0x2] sm:$0x1]
    %v101 = vperm.slane %v100, 0
    %v102 = vmul.f32 %v101, %v44
    %v103 = vmul.f32 %v101, %v45
    %v104 = vmul.f32 %v101, %v46
    %v105 = vmul.f32 %v101, %v47
    %v106 = vld [vmem:[#allocation5 + $0x5] sm:$0x1]
    %v107 = vperm.slane %v106, 0
    %v108 = vadd.f32 %v102, %v107
    %v109 = vadd.f32 %v103, %v107
    %v110 = vadd.f32 %v104, %v107
    %v111 = vadd.f32 %v105, %v107
    %v112 = vld [vmem:[#allocation5 + $0x8] sm:$0x1]
    %v113 = vtanh.pop %v108
    %v114 = vtanh.pop %v109
    %v115 = vtanh.pop %v110
    %v116 = vtanh.pop %v111
    %v117 = vperm.slane %v112, 0
    %v118 = vmul.f32 %v117, %v113
    %v119 = vmul.f32 %v117, %v114
    %v120 = vmul.f32 %v117, %v115
    %v121 = vmul.f32 %v117, %v116
    %v122 = vadd.f32 %v118, %v108
    %v123 = vadd.f32 %v119, %v109
    %v124 = vadd.f32 %v120, %v110
    %v125 = vadd.f32 %v121, %v111
    %v126 = vld [vmem:[#allocation5 + $0x9] sm:$0x1]
    %v127 = vperm.slane %v126, 0
    %v128 = vmul.f32 %v127, %v70
    %v129 = vmul.f32 %v127, %v71
    %v130 = vmul.f32 %v127, %v72
    %v131 = vmul.f32 %v127, %v73
    %v132 = vld [vmem:[#allocation5 + $0xa] sm:$0x1]
    %v133 = vperm.slane %v132, 0
    %v134 = vmul.f32 %v133, %v96
    %v135 = vmul.f32 %v133, %v97
    %v136 = vmul.f32 %v133, %v98
    %v137 = vmul.f32 %v133, %v99
    %v138 = vadd.f32 %v128, %v134
    %v139 = vadd.f32 %v129, %v135
    %v140 = vadd.f32 %v130, %v136
    %v141 = vadd.f32 %v131, %v137
    %v142 = vld [vmem:[#allocation5 + $0xb] sm:$0x1]
    %v143 = vperm.slane %v142, 0
    %v144 = vmul.f32 %v143, %v122
    %v145 = vmul.f32 %v143, %v123
    %v146 = vmul.f32 %v143, %v124
    %v147 = vmul.f32 %v143, %v125
    %v148 = vadd.f32 %v138, %v144
    %v149 = vadd.f32 %v139, %v145
    %v150 = vadd.f32 %v140, %v146
    %v151 = vadd.f32 %v141, %v147
    %v152 = vld [vmem:[#allocation5 + $0x12] sm:$0x1]
    %v153 = vperm.slane %v152, 0
    %v154 = vadd.f32 %v148, %v153
    %v155 = vadd.f32 %v149, %v153
    %v156 = vadd.f32 %v150, %v153
    %v157 = vadd.f32 %v151, %v153
    %v158 = vld [vmem:[#allocation5 + $0x15] sm:$0x1]
    %v159 = vtanh.pop %v154
    %v160 = vtanh.pop %v155
    %v161 = vtanh.pop %v156
    %v162 = vtanh.pop %v157
    %v163 = vperm.slane %v158, 0
    %v164 = vmul.f32 %v163, %v159
    %v165 = vmul.f32 %v163, %v160
    %v166 = vmul.f32 %v163, %v161
    %v167 = vmul.f32 %v163, %v162
    %v168 = vadd.f32 %v164, %v154
    %v169 = vadd.f32 %v165, %v155
    %v170 = vadd.f32 %v166, %v156
    %v171 = vadd.f32 %v167, %v157
    %v172 = vld [vmem:[#allocation5 + $0xc] sm:$0x1]
    %v173 = vperm.slane %v172, 0
    %v174 = vmul.f32 %v173, %v70
    %v175 = vmul.f32 %v173, %v71
    %v176 = vmul.f32 %v173, %v72
    %v177 = vmul.f32 %v173, %v73
    %v178 = vld [vmem:[#allocation5 + $0xd] sm:$0x1]
    %v179 = vperm.slane %v178, 0
    %v180 = vmul.f32 %v179, %v96
    %v181 = vmul.f32 %v179, %v97
    %v182 = vmul.f32 %v179, %v98
    %v183 = vmul.f32 %v179, %v99
    %v184 = vadd.f32 %v174, %v180
    %v185 = vadd.f32 %v175, %v181
    %v186 = vadd.f32 %v176, %v182
    %v187 = vadd.f32 %v177, %v183
    %v188 = vld [vmem:[#allocation5 + $0xe] sm:$0x1]
    %v189 = vperm.slane %v188, 0
    %v190 = vmul.f32 %v189, %v122
    %v191 = vmul.f32 %v189, %v123
    %v192 = vmul.f32 %v189, %v124
    %v193 = vmul.f32 %v189, %v125
    %v194 = vadd.f32 %v184, %v190
    %v195 = vadd.f32 %v185, %v191
    %v196 = vadd.f32 %v186, %v192
    %v197 = vadd.f32 %v187, %v193
    %v198 = vld [vmem:[#allocation5 + $0x13] sm:$0x1]
    %v199 = vperm.slane %v198, 0
    %v200 = vadd.f32 %v194, %v199
    %v201 = vadd.f32 %v195, %v199
    %v202 = vadd.f32 %v196, %v199
    %v203 = vadd.f32 %v197, %v199
    %v204 = vld [vmem:[#allocation5 + $0x16] sm:$0x1]
    %v205 = vtanh.pop %v200
    %v206 = vtanh.pop %v201
    %v207 = vtanh.pop %v202
    %v208 = vtanh.pop %v203
    %v209 = vperm.slane %v204, 0
    %v210 = vmul.f32 %v209, %v205
    %v211 = vmul.f32 %v209, %v206
    %v212 = vmul.f32 %v209, %v207
    %v213 = vmul.f32 %v209, %v208
    %v214 = vadd.f32 %v210, %v200
    %v215 = vadd.f32 %v211, %v201
    %v216 = vadd.f32 %v212, %v202
    %v217 = vadd.f32 %v213, %v203
    %v218 = vld [vmem:[#allocation5 + $0xf] sm:$0x1]
    %v219 = vperm.slane %v218, 0
    %v220 = vmul.f32 %v219, %v70
    %v221 = vmul.f32 %v219, %v71
    %v222 = vmul.f32 %v219, %v72
    %v223 = vmul.f32 %v219, %v73
    %v224 = vld [vmem:[#allocation5 + $0x10] sm:$0x1]
    %v225 = vperm.slane %v224, 0
    %v226 = vmul.f32 %v225, %v96
    %v227 = vmul.f32 %v225, %v97
    %v228 = vmul.f32 %v225, %v98
    %v229 = vmul.f32 %v225, %v99
    %v230 = vadd.f32 %v220, %v226
    %v231 = vadd.f32 %v221, %v227
    %v232 = vadd.f32 %v222, %v228
    %v233 = vadd.f32 %v223, %v229
    %v234 = vld [vmem:[#allocation5 + $0x11] sm:$0x1]
    %v235 = vperm.slane %v234, 0
    %v236 = vmul.f32 %v235, %v122
    %v237 = vmul.f32 %v235, %v123
    %v238 = vmul.f32 %v235, %v124
    %v239 = vmul.f32 %v235, %v125
    %v240 = vadd.f32 %v230, %v236
    %v241 = vadd.f32 %v231, %v237
    %v242 = vadd.f32 %v232, %v238
    %v243 = vadd.f32 %v233, %v239
    %v244 = vld [vmem:[#allocation5 + $0x14] sm:$0x1]
    %v245 = vperm.slane %v244, 0
    %v246 = vadd.f32 %v240, %v245
    %v247 = vadd.f32 %v241, %v245
    %v248 = vadd.f32 %v242, %v245
    %v249 = vadd.f32 %v243, %v245
    %v250 = vld [vmem:[#allocation5 + $0x17] sm:$0x1]
    %v251 = vtanh.pop %v246
    %v252 = vtanh.pop %v247
    %v253 = vtanh.pop %v248
    %v254 = vtanh.pop %v249
    %v255 = vperm.slane %v250, 0
    %v256 = vmul.f32 %v255, %v251
    %v257 = vmul.f32 %v255, %v252
    %v258 = vmul.f32 %v255, %v253
    %v259 = vmul.f32 %v255, %v254
    %v260 = vadd.f32 %v256, %v246
    %v261 = vadd.f32 %v257, %v247
    %v262 = vadd.f32 %v258, %v248
    %v263 = vadd.f32 %v259, %v249
    %v264 = vld [vmem:[#allocation5 + $0x18] sm:$0x1]
    %v265 = vperm.slane %v264, 0
    %v266 = vmul.f32 %v265, %v168
    %v267 = vmul.f32 %v265, %v169
    %v268 = vmul.f32 %v265, %v170
    %v269 = vmul.f32 %v265, %v171
    %v270 = vld [vmem:[#allocation5 + $0x19] sm:$0x1]
    %v271 = vperm.slane %v270, 0
    %v272 = vmul.f32 %v271, %v214
    %v273 = vmul.f32 %v271, %v215
    %v274 = vmul.f32 %v271, %v216
    %v275 = vmul.f32 %v271, %v217
    %v276 = vadd.f32 %v266, %v272
    %v277 = vadd.f32 %v267, %v273
    %v278 = vadd.f32 %v268, %v274
    %v279 = vadd.f32 %v269, %v275
    %v280 = vld [vmem:[#allocation5 + $0x1a] sm:$0x1]
    %v281 = vperm.slane %v280, 0
    %v282 = vmul.f32 %v281, %v260
    %v283 = vmul.f32 %v281, %v261
    %v284 = vmul.f32 %v281, %v262
    %v285 = vmul.f32 %v281, %v263
    %v286 = vadd.f32 %v276, %v282
    %v287 = vadd.f32 %v277, %v283
    %v288 = vadd.f32 %v278, %v284
    %v289 = vadd.f32 %v279, %v285
    %v290 = vld [vmem:[#allocation5 + $0x21] sm:$0x1]
    %v291 = vperm.slane %v290, 0
    %v292 = vadd.f32 %v286, %v291
    %v293 = vadd.f32 %v287, %v291
    %v294 = vadd.f32 %v288, %v291
    %v295 = vadd.f32 %v289, %v291
    %v296 = vld [vmem:[#allocation5 + $0x24] sm:$0x1]
    %v297 = vtanh.pop %v292
    %v298 = vtanh.pop %v293
    %v299 = vtanh.pop %v294
    %v300 = vtanh.pop %v295
    %v301 = vperm.slane %v296, 0
    %v302 = vmul.f32 %v301, %v297
    %v303 = vmul.f32 %v301, %v298
    %v304 = vmul.f32 %v301, %v299
    %v305 = vmul.f32 %v301, %v300
    %v306 = vadd.f32 %v302, %v292
    %v307 = vadd.f32 %v303, %v293
    %v308 = vadd.f32 %v304, %v294
    %v309 = vadd.f32 %v305, %v295
    %v310 = vld [vmem:[#allocation5 + $0x1b] sm:$0x1]
    %v311 = vperm.slane %v310, 0
    %v312 = vmul.f32 %v311, %v168
    %v313 = vmul.f32 %v311, %v169
    %v314 = vmul.f32 %v311, %v170
    %v315 = vmul.f32 %v311, %v171
    %v316 = vld [vmem:[#allocation5 + $0x1c] sm:$0x1]
    %v317 = vperm.slane %v316, 0
    %v318 = vmul.f32 %v317, %v214
    %v319 = vmul.f32 %v317, %v215
    %v320 = vmul.f32 %v317, %v216
    %v321 = vmul.f32 %v317, %v217
    %v322 = vadd.f32 %v312, %v318
    %v323 = vadd.f32 %v313, %v319
    %v324 = vadd.f32 %v314, %v320
    %v325 = vadd.f32 %v315, %v321
    %v326 = vld [vmem:[#allocation5 + $0x1d] sm:$0x1]
    %v327 = vperm.slane %v326, 0
    %v328 = vmul.f32 %v327, %v260
    %v329 = vmul.f32 %v327, %v261
    %v330 = vmul.f32 %v327, %v262
    %v331 = vmul.f32 %v327, %v263
    %v332 = vadd.f32 %v322, %v328
    %v333 = vadd.f32 %v323, %v329
    %v334 = vadd.f32 %v324, %v330
    %v335 = vadd.f32 %v325, %v331
    %v336 = vld [vmem:[#allocation5 + $0x22] sm:$0x1]
    %v337 = vperm.slane %v336, 0
    %v338 = vadd.f32 %v332, %v337
    %v339 = vadd.f32 %v333, %v337
    %v340 = vadd.f32 %v334, %v337
    %v341 = vadd.f32 %v335, %v337
    %v342 = vld [vmem:[#allocation5 + $0x25] sm:$0x1]
    %v343 = vtanh.pop %v338
    %v344 = vtanh.pop %v339
    %v345 = vtanh.pop %v340
    %v346 = vtanh.pop %v341
    %v347 = vperm.slane %v342, 0
    %v348 = vmul.f32 %v347, %v343
    %v349 = vmul.f32 %v347, %v344
    %v350 = vmul.f32 %v347, %v345
    %v351 = vmul.f32 %v347, %v346
    %v352 = vadd.f32 %v348, %v338
    %v353 = vadd.f32 %v349, %v339
    %v354 = vadd.f32 %v350, %v340
    %v355 = vadd.f32 %v351, %v341
    %v356 = vld [vmem:[#allocation5 + $0x1e] sm:$0x1]
    %v357 = vperm.slane %v356, 0
    %v358 = vmul.f32 %v357, %v168
    %v359 = vmul.f32 %v357, %v169
    %v360 = vmul.f32 %v357, %v170
    %v361 = vmul.f32 %v357, %v171
    %v362 = vld [vmem:[#allocation5 + $0x1f] sm:$0x1]
    %v363 = vperm.slane %v362, 0
    %v364 = vmul.f32 %v363, %v214
    %v365 = vmul.f32 %v363, %v215
    %v366 = vmul.f32 %v363, %v216
    %v367 = vmul.f32 %v363, %v217
    %v368 = vadd.f32 %v358, %v364
    %v369 = vadd.f32 %v359, %v365
    %v370 = vadd.f32 %v360, %v366
    %v371 = vadd.f32 %v361, %v367
    %v372 = vld [vmem:[#allocation5 + $0x20] sm:$0x1]
    %v373 = vperm.slane %v372, 0
    %v374 = vmul.f32 %v373, %v260
    %v375 = vmul.f32 %v373, %v261
    %v376 = vmul.f32 %v373, %v262
    %v377 = vmul.f32 %v373, %v263
    %v378 = vadd.f32 %v368, %v374
    %v379 = vadd.f32 %v369, %v375
    %v380 = vadd.f32 %v370, %v376
    %v381 = vadd.f32 %v371, %v377
    %v382 = vld [vmem:[#allocation5 + $0x23] sm:$0x1]
    %v383 = vperm.slane %v382, 0
    %v384 = vadd.f32 %v378, %v383
    %v385 = vadd.f32 %v379, %v383
    %v386 = vadd.f32 %v380, %v383
    %v387 = vadd.f32 %v381, %v383
    %v388 = vld [vmem:[#allocation5 + $0x26] sm:$0x1]
    %v389 = vtanh.pop %v384
    %v390 = vtanh.pop %v385
    %v391 = vtanh.pop %v386
    %v392 = vtanh.pop %v387
    %v393 = vperm.slane %v388, 0
    %v394 = vmul.f32 %v393, %v389
    %v395 = vmul.f32 %v393, %v390
    %v396 = vmul.f32 %v393, %v391
    %v397 = vmul.f32 %v393, %v392
    %v398 = vadd.f32 %v394, %v384
    %v399 = vadd.f32 %v395, %v385
    %v400 = vadd.f32 %v396, %v386
    %v401 = vadd.f32 %v397, %v387
    %v402 = vld [vmem:[#allocation5 + $0x27] sm:$0x1]
    %v403 = vperm.slane %v402, 0
    %v404 = vmul.f32 %v403, %v306
    %v405 = vmul.f32 %v403, %v307
    %v406 = vmul.f32 %v403, %v308
    %v407 = vmul.f32 %v403, %v309
    %v408 = vld [vmem:[#allocation5 + $0x28] sm:$0x1]
    %v409 = vperm.slane %v408, 0
    %v410 = vmul.f32 %v409, %v352
    %v411 = vmul.f32 %v409, %v353
    %v412 = vmul.f32 %v409, %v354
    %v413 = vmul.f32 %v409, %v355
    %v414 = vadd.f32 %v404, %v410
    %v415 = vadd.f32 %v405, %v411
    %v416 = vadd.f32 %v406, %v412
    %v417 = vadd.f32 %v407, %v413
    %v418 = vld [vmem:[#allocation5 + $0x29] sm:$0x1]
    %v419 = vperm.slane %v418, 0
    %v420 = vmul.f32 %v419, %v398
    %v421 = vmul.f32 %v419, %v399
    %v422 = vmul.f32 %v419, %v400
    %v423 = vmul.f32 %v419, %v401
    %v424 = vadd.f32 %v414, %v420
    %v425 = vadd.f32 %v415, %v421
    %v426 = vadd.f32 %v416, %v422
    %v427 = vadd.f32 %v417, %v423
    %v428 = vld [vmem:[#allocation5 + $0x2a] sm:$0x1]
    %v429 = vperm.slane %v428, 0
    %v430 = vadd.f32 %v424, %v429
    %v431 = vadd.f32 %v425, %v429
    %v432 = vadd.f32 %v426, %v429
    %v433 = vadd.f32 %v427, %v429
    %v434 = vmul.f32 %v430, 0.5
    %v435 = vmul.f32 %v431, 0.5
    %v436 = vmul.f32 %v432, 0.5
    %v437 = vmul.f32 %v433, 0.5
    %v438 = vtanh.pop %v434
    %v439 = vtanh.pop %v435
    %v440 = vtanh.pop %v436
    %v441 = vtanh.pop %v437
    %v442 = vmul.f32 %v438, 0.5
    %v443 = vmul.f32 %v439, 0.5
    %v444 = vmul.f32 %v440, 0.5
    %v445 = vmul.f32 %v441, 0.5
    %v446 = vadd.f32 %v442, 0.5
    %v447 = vadd.f32 %v443, 0.5
    %v448 = vadd.f32 %v444, 0.5
    %v449 = vadd.f32 %v445, 0.5
    %450 = vst [vmem:[#allocation7] sm:$0xff] %v446
    %451 = vst [vmem:[#allocation7 + $0x8] sm:$0xff] %v447
    %452 = vst [vmem:[#allocation7 + $0x10] sm:$0xff] %v448
    %453 = vst [vmem:[#allocation7 + $0x18] sm:$0xff] %v449
    // Predicated region
    $region18: #{tpu_custom_call.1} parent=1 // pred_check
      _
    $region19: #{tpu_custom_call.1} parent=1 // pred_check_branch
      %455 = sbr.rel (0) target = $region21
    $region20: #{tpu_custom_call.1} parent=1 // pred_region
      %457 = vsyncadd [#allocation4], 128
      %s458 = sshll.u32 [#allocation7], 4
      %s459 = int_to_ptr.vmem [resolvable:$true] %s458
      %s460 = sshll.u32 %s2, 4
      %s461 = int_to_ptr.hbm [resolvable:$true] %s460
      %466 = dma.vmem_to_hbm [thread:$0]  %s459, 384, %s461, [#allocation4], 128, 128, 8
    $region21: #{tpu_custom_call.1} parent=1 // pred_fallthru
      _
    // Predicated region
    $region22: #{tpu_custom_call.1} parent=1 // pred_check
      _
    $region23: #{tpu_custom_call.1} parent=1 // pred_check_branch
      %468 = sbr.rel (0) target = $region25
    $region24: #{tpu_custom_call.1} parent=1 // pred_region
      %470 = dma.done [#allocation4], 512
    $region25: #{tpu_custom_call.1} parent=1 // pred_fallthru
      _
    %471 = vsyncpa [#allocation3], 1
    %472 = vsyncpa [#allocation6], 1
    %473 = vsyncpa [#allocation4], 1

</llo_original>
